<compile_context>
chip_gen: v7x
topology: tpu7x:2x2x1
jax: 0.10.0
libtpu: 0.0.40
codegen_flags: <defaults>
</compile_context>

<pallas_src>
import math
import jax
import jax.numpy as jnp
from jax.experimental import pallas as pl
from jax.experimental.pallas import tpu as pltpu

IN_DIM = 64 * 6 + 1          # 385
K_MAIN = 384                 # MXU-aligned part of the first contraction
DIMS = [IN_DIM, 48, 24, 16, 8, 1]
NEG_SLOPE = 0.01             # nn.LeakyReLU default


def _leaky_relu(v):
    return jnp.where(v > 0, v, NEG_SLOPE * v)


def _round_up(n, m):
    return ((n + m - 1) // m) * m


def mlp_kernel(x_ref,
               w1a_ref, w1b_ref, b1_ref,
               w2_ref, b2_ref,
               w3_ref, b3_ref,
               w4_ref, b4_ref,
               w5_ref, b5_ref,
               o_ref):
    # x block: (TB, 385) bf16. Split the ragged K: 384 columns go to the MXU,
    # the 385th feature is a rank-1 update handled on the VPU.
    x = x_ref[...]
    x_main = x[:, :K_MAIN]                              # (TB, 384) bf16
    x_last = x[:, K_MAIN:].astype(jnp.float32)          # (TB, 1)   f32

    h = jnp.dot(x_main, w1a_ref[...],
                preferred_element_type=jnp.float32)     # (TB, 48) f32 acc
    h = h + x_last * w1b_ref[...] + b1_ref[...]
    h = _leaky_relu(h)

    # Tiny tail layers: negligible FLOPs, keep them fused in f32.
    h = _leaky_relu(jnp.dot(h, w2_ref[...],
                            preferred_element_type=jnp.float32) + b2_ref[...])
    h = _leaky_relu(jnp.dot(h, w3_ref[...],
                            preferred_element_type=jnp.float32) + b3_ref[...])
    h = _leaky_relu(jnp.dot(h, w4_ref[...],
                            preferred_element_type=jnp.float32) + b4_ref[...])
    y = jnp.dot(h, w5_ref[...],
                preferred_element_type=jnp.float32) + b5_ref[...]
    o_ref[...] = y.astype(o_ref.dtype)


def mlp_forward(x, params, *, block_rows=1024):
    """x: (batch, 385) float32. params: list of (W:(in,out) f32, b:(1,out) f32)."""
    B = x.shape[0]
    TB = min(block_rows, _round_up(B, 16))       # bf16-friendly sublane multiple
    B_pad = _round_up(B, TB)

    # Stream x in bf16 (the kernel is HBM-bandwidth bound on reading x).
    x_bf = x.astype(jnp.bfloat16)
    if B_pad != B:
        x_bf = jnp.pad(x_bf, ((0, B_pad - B), (0, 0)))

    # Layer 1 weight: bf16 for the MXU-aligned 384 rows, f32 row for feature 385.
    w1, b1 = params[0]
    w1a = w1[:K_MAIN].astype(jnp.bfloat16)       # (384, 48) bf16
    w1b = w1[K_MAIN:]                            # (1, 48)   f32
    flat_params = [w1a, w1b, b1]
    for (w, b) in params[1:]:
        flat_params += [w, b]                    # tiny tail layers stay f32

    grid = (B_pad // TB,)

    in_specs = [pl.BlockSpec((TB, IN_DIM), lambda i: (i, 0))]
    for p in flat_params:
        # Constant block index -> weights/biases stay VMEM-resident, no re-DMA.
        in_specs.append(pl.BlockSpec(p.shape, lambda i: (0, 0)))

    out = pl.pallas_call(
        mlp_kernel,
        grid=grid,
        out_shape=jax.ShapeDtypeStruct((B_pad, DIMS[-1]), jnp.float32),
        in_specs=in_specs,
        out_specs=pl.BlockSpec((TB, DIMS[-1]), lambda i: (i, 0)),
        compiler_params=pltpu.CompilerParams(
            dimension_semantics=("parallel",)),
    )(x_bf, *flat_params)

    return out[:B]


def init_params(key):
    """Deterministic init mimicking PyTorch Linear default (uniform +-1/sqrt(fan_in))."""
    params = []
    for i in range(len(DIMS) - 1):
        fan_in, fan_out = DIMS[i], DIMS[i + 1]
        key, kw, kb = jax.random.split(key, 3)
        bound = 1.0 / math.sqrt(fan_in)
        w = jax.random.uniform(kw, (fan_in, fan_out), jnp.float32, -bound, bound)
        b = jax.random.uniform(kb, (1, fan_out), jnp.float32, -bound, bound)
        params.append((w, b))
    return params


def reference_forward(x, params):
    """Pure f32 reference matching the PyTorch module semantics."""
    h = x
    for i, (w, b) in enumerate(params):
        h = h @ w + b
        if i < len(params) - 1:
            h = _leaky_relu(h)
    return h


if __name__ == "__main__":
    key = jax.random.PRNGKey(0)
    key, kx = jax.random.split(key)
    batch = 8
    x = jax.random.normal(kx, (batch, IN_DIM), dtype=jnp.float32)

    params = init_params(key)

    out = jax.block_until_ready(mlp_forward(x, params))
    ref = reference_forward(x, params)

    assert out.shape == (batch, 1)
    # Tolerance covers the bf16 rounding of the streamed x / layer-1 weights.
    assert jnp.allclose(out, ref, atol=2e-2, rtol=2e-2), "mismatch vs reference"

    print("KERNEL_OK")
</pallas_src>

<mosaic_0001>
module attributes {stable_mosaic.version = 11 : i64} {
  func.func @mlp_kernel(%arg0: i32, %arg1: memref<16x385xbf16, #tpu.memory_space<vmem>>, %arg2: memref<384x48xbf16, #tpu.memory_space<vmem>>, %arg3: memref<1x48xf32, #tpu.memory_space<vmem>>, %arg4: memref<1x48xf32, #tpu.memory_space<vmem>>, %arg5: memref<48x24xf32, #tpu.memory_space<vmem>>, %arg6: memref<1x24xf32, #tpu.memory_space<vmem>>, %arg7: memref<24x16xf32, #tpu.memory_space<vmem>>, %arg8: memref<1x16xf32, #tpu.memory_space<vmem>>, %arg9: memref<16x8xf32, #tpu.memory_space<vmem>>, %arg10: memref<1x8xf32, #tpu.memory_space<vmem>>, %arg11: memref<8x1xf32, #tpu.memory_space<vmem>>, %arg12: memref<1x1xf32, #tpu.memory_space<vmem>>, %arg13: memref<16x1xf32, #tpu.memory_space<vmem>>) attributes {dimension_semantics = [#tpu.dimension_semantics<parallel>], iteration_bounds = array<i64: 1>, scalar_prefetch = 0 : i64, scratch_operands = 0 : i64, tpu.core_type = #tpu.core_type<tc>, window_params = [{transform_indices = @transform_0, window_bounds = array<i64: 16, 385>}, {pipeline_mode = #tpu.pipeline_mode<synchronous>, transform_indices = @transform_1, window_bounds = array<i64: 384, 48>}, {pipeline_mode = #tpu.pipeline_mode<synchronous>, transform_indices = @transform_2, window_bounds = array<i64: 1, 48>}, {pipeline_mode = #tpu.pipeline_mode<synchronous>, transform_indices = @transform_3, window_bounds = array<i64: 1, 48>}, {pipeline_mode = #tpu.pipeline_mode<synchronous>, transform_indices = @transform_4, window_bounds = array<i64: 48, 24>}, {pipeline_mode = #tpu.pipeline_mode<synchronous>, transform_indices = @transform_5, window_bounds = array<i64: 1, 24>}, {pipeline_mode = #tpu.pipeline_mode<synchronous>, transform_indices = @transform_6, window_bounds = array<i64: 24, 16>}, {pipeline_mode = #tpu.pipeline_mode<synchronous>, transform_indices = @transform_7, window_bounds = array<i64: 1, 16>}, {pipeline_mode = #tpu.pipeline_mode<synchronous>, transform_indices = @transform_8, window_bounds = array<i64: 16, 8>}, {pipeline_mode = #tpu.pipeline_mode<synchronous>, transform_indices = @transform_9, window_bounds = array<i64: 1, 8>}, {pipeline_mode = #tpu.pipeline_mode<synchronous>, transform_indices = @transform_10, window_bounds = array<i64: 8, 1>}, {pipeline_mode = #tpu.pipeline_mode<synchronous>, transform_indices = @transform_11, window_bounds = array<i64: 1, 1>}, {transform_indices = @transform_12, window_bounds = array<i64: 16, 1>}]} {
    %c0 = arith.constant 0 : index
    %c0_0 = arith.constant 0 : index
    %0 = vector.load %arg1[%c0, %c0_0] : memref<16x385xbf16, #tpu.memory_space<vmem>>, vector<16x385xbf16>
    %1 = vector.extract_strided_slice %0 {offsets = [0, 0], sizes = [16, 384], strides = [1, 1]} : vector<16x385xbf16> to vector<16x384xbf16>
    %2 = vector.extract_strided_slice %0 {offsets = [0, 384], sizes = [16, 1], strides = [1, 1]} : vector<16x385xbf16> to vector<16x1xbf16>
    %3 = arith.extf %2 : vector<16x1xbf16> to vector<16x1xf32>
    %c0_1 = arith.constant 0 : index
    %c0_2 = arith.constant 0 : index
    %4 = vector.load %arg2[%c0_1, %c0_2] : memref<384x48xbf16, #tpu.memory_space<vmem>>, vector<384x48xbf16>
    %cst = arith.constant dense<0.000000e+00> : vector<16x48xf32>
    %5 = tpu.matmul %1, %4, %cst {dimension_numbers = #tpu.dot_dimension_numbers<[1], [0], [0], [1], [0, 0, 1, 1], [], []>} : vector<16x384xbf16>, vector<384x48xbf16>, vector<16x48xf32> -> vector<16x48xf32>
    %c0_3 = arith.constant 0 : index
    %c0_4 = arith.constant 0 : index
    %6 = vector.load %arg3[%c0_3, %c0_4] : memref<1x48xf32, #tpu.memory_space<vmem>>, vector<1x48xf32>
    %7 = vector.broadcast %3 : vector<16x1xf32> to vector<16x48xf32>
    %8 = vector.broadcast %6 : vector<1x48xf32> to vector<16x48xf32>
    %9 = arith.mulf %7, %8 : vector<16x48xf32>
    %10 = arith.addf %5, %9 : vector<16x48xf32>
    %c0_5 = arith.constant 0 : index
    %c0_6 = arith.constant 0 : index
    %11 = vector.load %arg4[%c0_5, %c0_6] : memref<1x48xf32, #tpu.memory_space<vmem>>, vector<1x48xf32>
    %12 = vector.broadcast %11 : vector<1x48xf32> to vector<16x48xf32>
    %13 = arith.addf %10, %12 : vector<16x48xf32>
    %cst_7 = arith.constant 0.000000e+00 : f32
    %14 = vector.broadcast %cst_7 : f32 to vector<16x48xf32>
    %15 = arith.cmpf ogt, %13, %14 : vector<16x48xf32>
    %cst_8 = arith.constant 0.00999999977 : f32
    %16 = vector.broadcast %cst_8 : f32 to vector<16x48xf32>
    %17 = arith.mulf %16, %13 : vector<16x48xf32>
    %18 = arith.select %15, %13, %17 : vector<16x48xi1>, vector<16x48xf32>
    %c0_9 = arith.constant 0 : index
    %c0_10 = arith.constant 0 : index
    %19 = vector.load %arg5[%c0_9, %c0_10] : memref<48x24xf32, #tpu.memory_space<vmem>>, vector<48x24xf32>
    %cst_11 = arith.constant dense<0.000000e+00> : vector<16x24xf32>
    %20 = tpu.matmul %18, %19, %cst_11 {dimension_numbers = #tpu.dot_dimension_numbers<[1], [0], [0], [1], [0, 0, 1, 1], [], []>} : vector<16x48xf32>, vector<48x24xf32>, vector<16x24xf32> -> vector<16x24xf32>
    %c0_12 = arith.constant 0 : index
    %c0_13 = arith.constant 0 : index
    %21 = vector.load %arg6[%c0_12, %c0_13] : memref<1x24xf32, #tpu.memory_space<vmem>>, vector<1x24xf32>
    %22 = vector.broadcast %21 : vector<1x24xf32> to vector<16x24xf32>
    %23 = arith.addf %20, %22 : vector<16x24xf32>
    %cst_14 = arith.constant 0.000000e+00 : f32
    %24 = vector.broadcast %cst_14 : f32 to vector<16x24xf32>
    %25 = arith.cmpf ogt, %23, %24 : vector<16x24xf32>
    %cst_15 = arith.constant 0.00999999977 : f32
    %26 = vector.broadcast %cst_15 : f32 to vector<16x24xf32>
    %27 = arith.mulf %26, %23 : vector<16x24xf32>
    %28 = arith.select %25, %23, %27 : vector<16x24xi1>, vector<16x24xf32>
    %c0_16 = arith.constant 0 : index
    %c0_17 = arith.constant 0 : index
    %29 = vector.load %arg7[%c0_16, %c0_17] : memref<24x16xf32, #tpu.memory_space<vmem>>, vector<24x16xf32>
    %cst_18 = arith.constant dense<0.000000e+00> : vector<16x16xf32>
    %30 = tpu.matmul %28, %29, %cst_18 {dimension_numbers = #tpu.dot_dimension_numbers<[1], [0], [0], [1], [0, 0, 1, 1], [], []>} : vector<16x24xf32>, vector<24x16xf32>, vector<16x16xf32> -> vector<16x16xf32>
    %c0_19 = arith.constant 0 : index
    %c0_20 = arith.constant 0 : index
    %31 = vector.load %arg8[%c0_19, %c0_20] : memref<1x16xf32, #tpu.memory_space<vmem>>, vector<1x16xf32>
    %32 = vector.broadcast %31 : vector<1x16xf32> to vector<16x16xf32>
    %33 = arith.addf %30, %32 : vector<16x16xf32>
    %cst_21 = arith.constant 0.000000e+00 : f32
    %34 = vector.broadcast %cst_21 : f32 to vector<16x16xf32>
    %35 = arith.cmpf ogt, %33, %34 : vector<16x16xf32>
    %cst_22 = arith.constant 0.00999999977 : f32
    %36 = vector.broadcast %cst_22 : f32 to vector<16x16xf32>
    %37 = arith.mulf %36, %33 : vector<16x16xf32>
    %38 = arith.select %35, %33, %37 : vector<16x16xi1>, vector<16x16xf32>
    %c0_23 = arith.constant 0 : index
    %c0_24 = arith.constant 0 : index
    %39 = vector.load %arg9[%c0_23, %c0_24] : memref<16x8xf32, #tpu.memory_space<vmem>>, vector<16x8xf32>
    %cst_25 = arith.constant dense<0.000000e+00> : vector<16x8xf32>
    %40 = tpu.matmul %38, %39, %cst_25 {dimension_numbers = #tpu.dot_dimension_numbers<[1], [0], [0], [1], [0, 0, 1, 1], [], []>} : vector<16x16xf32>, vector<16x8xf32>, vector<16x8xf32> -> vector<16x8xf32>
    %c0_26 = arith.constant 0 : index
    %c0_27 = arith.constant 0 : index
    %41 = vector.load %arg10[%c0_26, %c0_27] : memref<1x8xf32, #tpu.memory_space<vmem>>, vector<1x8xf32>
    %42 = vector.broadcast %41 : vector<1x8xf32> to vector<16x8xf32>
    %43 = arith.addf %40, %42 : vector<16x8xf32>
    %cst_28 = arith.constant 0.000000e+00 : f32
    %44 = vector.broadcast %cst_28 : f32 to vector<16x8xf32>
    %45 = arith.cmpf ogt, %43, %44 : vector<16x8xf32>
    %cst_29 = arith.constant 0.00999999977 : f32
    %46 = vector.broadcast %cst_29 : f32 to vector<16x8xf32>
    %47 = arith.mulf %46, %43 : vector<16x8xf32>
    %48 = arith.select %45, %43, %47 : vector<16x8xi1>, vector<16x8xf32>
    %c0_30 = arith.constant 0 : index
    %c0_31 = arith.constant 0 : index
    %49 = vector.load %arg11[%c0_30, %c0_31] : memref<8x1xf32, #tpu.memory_space<vmem>>, vector<8x1xf32>
    %cst_32 = arith.constant dense<0.000000e+00> : vector<16x1xf32>
    %50 = tpu.matmul %48, %49, %cst_32 {dimension_numbers = #tpu.dot_dimension_numbers<[1], [0], [0], [1], [0, 0, 1, 1], [], []>} : vector<16x8xf32>, vector<8x1xf32>, vector<16x1xf32> -> vector<16x1xf32>
    %c0_33 = arith.constant 0 : index
    %c0_34 = arith.constant 0 : index
    %51 = vector.load %arg12[%c0_33, %c0_34] : memref<1x1xf32, #tpu.memory_space<vmem>>, vector<1x1xf32>
    %52 = vector.broadcast %51 : vector<1x1xf32> to vector<16x1xf32>
    %53 = arith.addf %50, %52 : vector<16x1xf32>
    %c0_35 = arith.constant 0 : index
    %c0_36 = arith.constant 0 : index
    %54 = vector.load %arg13[%c0_35, %c0_36] : memref<16x1xf32, #tpu.memory_space<vmem>>, vector<16x1xf32>
    tpu.vector_store %arg13[%c0_35, %c0_36], %53 {strides = array<i32>} : memref<16x1xf32, #tpu.memory_space<vmem>>, vector<16x1xf32>,
    return
  }
  func.func @transform_0(%arg0: i32) -> (i32, i32) {
    %c0_i32 = arith.constant 0 : i32
    %c0_i32_0 = arith.constant 0 : i32
    return %arg0, %c0_i32 : i32, i32
  }
  func.func @transform_1(%arg0: i32) -> (i32, i32) {
    %c0_i32 = arith.constant 0 : i32
    %c0_i32_0 = arith.constant 0 : i32
    %c0_i32_1 = arith.constant 0 : i32
    return %c0_i32, %c0_i32_0 : i32, i32
  }
  func.func @transform_2(%arg0: i32) -> (i32, i32) {
    %c0_i32 = arith.constant 0 : i32
    %c0_i32_0 = arith.constant 0 : i32
    %c0_i32_1 = arith.constant 0 : i32
    return %c0_i32, %c0_i32_0 : i32, i32
  }
  func.func @transform_3(%arg0: i32) -> (i32, i32) {
    %c0_i32 = arith.constant 0 : i32
    %c0_i32_0 = arith.constant 0 : i32
    %c0_i32_1 = arith.constant 0 : i32
    return %c0_i32, %c0_i32_0 : i32, i32
  }
  func.func @transform_4(%arg0: i32) -> (i32, i32) {
    %c0_i32 = arith.constant 0 : i32
    %c0_i32_0 = arith.constant 0 : i32
    %c0_i32_1 = arith.constant 0 : i32
    return %c0_i32, %c0_i32_0 : i32, i32
  }
  func.func @transform_5(%arg0: i32) -> (i32, i32) {
    %c0_i32 = arith.constant 0 : i32
    %c0_i32_0 = arith.constant 0 : i32
    %c0_i32_1 = arith.constant 0 : i32
    return %c0_i32, %c0_i32_0 : i32, i32
  }
  func.func @transform_6(%arg0: i32) -> (i32, i32) {
    %c0_i32 = arith.constant 0 : i32
    %c0_i32_0 = arith.constant 0 : i32
    %c0_i32_1 = arith.constant 0 : i32
    return %c0_i32, %c0_i32_0 : i32, i32
  }
  func.func @transform_7(%arg0: i32) -> (i32, i32) {
    %c0_i32 = arith.constant 0 : i32
    %c0_i32_0 = arith.constant 0 : i32
    %c0_i32_1 = arith.constant 0 : i32
    return %c0_i32, %c0_i32_0 : i32, i32
  }
  func.func @transform_8(%arg0: i32) -> (i32, i32) {
    %c0_i32 = arith.constant 0 : i32
    %c0_i32_0 = arith.constant 0 : i32
    %c0_i32_1 = arith.constant 0 : i32
    return %c0_i32, %c0_i32_0 : i32, i32
  }
  func.func @transform_9(%arg0: i32) -> (i32, i32) {
    %c0_i32 = arith.constant 0 : i32
    %c0_i32_0 = arith.constant 0 : i32
    %c0_i32_1 = arith.constant 0 : i32
    return %c0_i32, %c0_i32_0 : i32, i32
  }
  func.func @transform_10(%arg0: i32) -> (i32, i32) {
    %c0_i32 = arith.constant 0 : i32
    %c0_i32_0 = arith.constant 0 : i32
    %c0_i32_1 = arith.constant 0 : i32
    return %c0_i32, %c0_i32_0 : i32, i32
  }
  func.func @transform_11(%arg0: i32) -> (i32, i32) {
    %c0_i32 = arith.constant 0 : i32
    %c0_i32_0 = arith.constant 0 : i32
    %c0_i32_1 = arith.constant 0 : i32
    return %c0_i32, %c0_i32_0 : i32, i32
  }
  func.func @transform_12(%arg0: i32) -> (i32, i32) {
    %c0_i32 = arith.constant 0 : i32
    %c0_i32_0 = arith.constant 0 : i32
    return %arg0, %c0_i32 : i32, i32
  }
}

</mosaic_0001>

<llo_original>
// kernel: tpu_custom_call.1
$region0: #{tpu_custom_call.1}
  #allocation0 [shape = 'u32[]', space=smem, size = 0x4, offset = 0x4, fixed_abs, tag = 'smem constant byte address 0x4 - core index']
  #allocation1 [shape = 'u32[144,128]{1,0:T(1,128)}', space=vmem, size = 0x12000, scoped, tag = 'internal scratch']
  #allocation2 [shape = 'f32[1,1]{1,0:T(1,128)S(1)}', space=vmem, size = 0x200, scoped, tag = 'scoped memory for tpu_custom_call.1']
  %s0 = inlined_call_operand.vmem [shape: bf16[16,385], index: 0, kind: input, shape index: {}]
  %s1 = inlined_call_operand.vmem [shape: bf16[384,48], index: 1, kind: input, shape index: {}]
  %s2 = inlined_call_operand.vmem [shape: f32[1,48], index: 2, kind: input, shape index: {}]
  %s3 = inlined_call_operand.vmem [shape: f32[1,48], index: 3, kind: input, shape index: {}]
  %s4 = inlined_call_operand.vmem [shape: f32[48,24], index: 4, kind: input, shape index: {}]
  %s5 = inlined_call_operand.vmem [shape: f32[1,24], index: 5, kind: input, shape index: {}]
  %s6 = inlined_call_operand.vmem [shape: f32[24,16], index: 6, kind: input, shape index: {}]
  %s7 = inlined_call_operand.vmem [shape: f32[1,16], index: 7, kind: input, shape index: {}]
  %s8 = inlined_call_operand.vmem [shape: f32[16,8], index: 8, kind: input, shape index: {}]
  %s9 = inlined_call_operand.vmem [shape: f32[1,8], index: 9, kind: input, shape index: {}]
  %s10 = inlined_call_operand.vmem [shape: f32[8,1], index: 10, kind: input, shape index: {}]
  %s11 = inlined_call_operand.<no memory space> [shape: f32[1,1], index: 11, kind: input, shape index: {}]
  %s12 = inlined_call_operand.vmem [shape: f32[16,1], index: 12, kind: output, shape index: {}]
  %s13 = sld [smem:[#allocation0]]
  $region58: #{tpu_custom_call.1} parent=0
    _
  %s15 = ssub.s32 1, %s13
  %s16 = scalar_select 0, %s15, %s13
  %v17 = vstv %s11
  %18 = vst [vmem:[#allocation2] sm:$0x1] %v17
  // Predicated region
  $region2: #{tpu_custom_call.1} parent=0 // pred_check
    _
  $region3: #{tpu_custom_call.1} parent=0 // pred_check_branch
    %20 = sbr.rel (0) target = $region5
  $region4: #{tpu_custom_call.1} parent=0 // pred_region
    _
  $region5: #{tpu_custom_call.1} parent=0 // pred_fallthru
    _
  // Predicated region
  $region6: #{tpu_custom_call.1} parent=0 // pred_check
    _
  $region7: #{tpu_custom_call.1} parent=0 // pred_check_branch
    %22 = sbr.rel (0) target = $region9
  $region8: #{tpu_custom_call.1} parent=0 // pred_region
    _
  $region9: #{tpu_custom_call.1} parent=0 // pred_fallthru
    _
  // Predicated region
  $region10: #{tpu_custom_call.1} parent=0 // pred_check
    _
  $region11: #{tpu_custom_call.1} parent=0 // pred_check_branch
    %24 = sbr.rel (0) target = $region13
  $region12: #{tpu_custom_call.1} parent=0 // pred_region
    _
  $region13: #{tpu_custom_call.1} parent=0 // pred_fallthru
    _
  // Predicated region
  $region14: #{tpu_custom_call.1} parent=0 // pred_check
    _
  $region15: #{tpu_custom_call.1} parent=0 // pred_check_branch
    %26 = sbr.rel (0) target = $region17
  $region16: #{tpu_custom_call.1} parent=0 // pred_region
    _
  $region17: #{tpu_custom_call.1} parent=0 // pred_fallthru
    _
  // Predicated region
  $region18: #{tpu_custom_call.1} parent=0 // pred_check
    _
  $region19: #{tpu_custom_call.1} parent=0 // pred_check_branch
    %28 = sbr.rel (0) target = $region21
  $region20: #{tpu_custom_call.1} parent=0 // pred_region
    _
  $region21: #{tpu_custom_call.1} parent=0 // pred_fallthru
    _
  // Predicated region
  $region22: #{tpu_custom_call.1} parent=0 // pred_check
    _
  $region23: #{tpu_custom_call.1} parent=0 // pred_check_branch
    %30 = sbr.rel (0) target = $region25
  $region24: #{tpu_custom_call.1} parent=0 // pred_region
    _
  $region25: #{tpu_custom_call.1} parent=0 // pred_fallthru
    _
  // Predicated region
  $region26: #{tpu_custom_call.1} parent=0 // pred_check
    _
  $region27: #{tpu_custom_call.1} parent=0 // pred_check_branch
    %32 = sbr.rel (0) target = $region29
  $region28: #{tpu_custom_call.1} parent=0 // pred_region
    _
  $region29: #{tpu_custom_call.1} parent=0 // pred_fallthru
    _
  // Predicated region
  $region30: #{tpu_custom_call.1} parent=0 // pred_check
    _
  $region31: #{tpu_custom_call.1} parent=0 // pred_check_branch
    %34 = sbr.rel (0) target = $region33
  $region32: #{tpu_custom_call.1} parent=0 // pred_region
    _
  $region33: #{tpu_custom_call.1} parent=0 // pred_fallthru
    _
  // Predicated region
  $region34: #{tpu_custom_call.1} parent=0 // pred_check
    _
  $region35: #{tpu_custom_call.1} parent=0 // pred_check_branch
    %36 = sbr.rel (0) target = $region37
  $region36: #{tpu_custom_call.1} parent=0 // pred_region
    _
  $region37: #{tpu_custom_call.1} parent=0 // pred_fallthru
    _
  // Predicated region
  $region38: #{tpu_custom_call.1} parent=0 // pred_check
    _
  $region39: #{tpu_custom_call.1} parent=0 // pred_check_branch
    %38 = sbr.rel (0) target = $region41
  $region40: #{tpu_custom_call.1} parent=0 // pred_region
    _
  $region41: #{tpu_custom_call.1} parent=0 // pred_fallthru
    _
  // Predicated region
  $region42: #{tpu_custom_call.1} parent=0 // pred_check
    _
  $region43: #{tpu_custom_call.1} parent=0 // pred_check_branch
    %40 = sbr.rel (0) target = $region45
  $region44: #{tpu_custom_call.1} parent=0 // pred_region
    _
  $region45: #{tpu_custom_call.1} parent=0 // pred_fallthru
    _
  // Predicated region
  $region46: #{tpu_custom_call.1} parent=0 // pred_check
    _
  $region47: #{tpu_custom_call.1} parent=0 // pred_check_branch
    %42 = sbr.rel (0) target = $region49
  $region48: #{tpu_custom_call.1} parent=0 // pred_region
    _
  $region49: #{tpu_custom_call.1} parent=0 // pred_fallthru
    _
  %v44 = vld [vmem:[%s0] sm:$0xff]
  %v45 = vld [vmem:[%s0 + $0x8] sm:$0xff]
  %v46 = vld [vmem:[%s0 + $0x10] sm:$0xff]
  %v47 = vld [vmem:[%s0 + $0x18] sm:$0xff]
  %v50 = vrot.slane %v45, 4
  %v51 = vrot.slane %v47, 4
  %v54 = vunpack.c.l.bf16 %v50
  %v55 = vunpack.c.l.bf16 %v51
  %v56 = vld [vmem:[%s1] sm:$0xf]
  %v57 = vld [vmem:[%s1 + $0x4] sm:$0xf]
  %v58 = vld [vmem:[%s1 + $0x8] sm:$0xf]
  %v59 = vld [vmem:[%s1 + $0xc] sm:$0xf]
  %v60 = vld [vmem:[%s1 + $0x10] sm:$0xf]
  %v61 = vld [vmem:[%s1 + $0x14] sm:$0xf]
  %v62 = vld [vmem:[%s1 + $0x18] sm:$0xf]
  %v63 = vld [vmem:[%s1 + $0x1c] sm:$0xf]
  %v64 = vld [vmem:[%s1 + $0x20] sm:$0xf]
  %v65 = vld [vmem:[%s1 + $0x24] sm:$0xf]
  %v66 = vld [vmem:[%s1 + $0x28] sm:$0xf]
  %v67 = vld [vmem:[%s1 + $0x2c] sm:$0xf]
  %v68 = vld [vmem:[%s1 + $0x30] sm:$0xf]
  %v69 = vld [vmem:[%s1 + $0x34] sm:$0xf]
  %v70 = vld [vmem:[%s1 + $0x38] sm:$0xf]
  %v71 = vld [vmem:[%s1 + $0x3c] sm:$0xf]
  %v72 = vld [vmem:[%s1 + $0x40] sm:$0xf]
  %v73 = vld [vmem:[%s1 + $0x44] sm:$0xf]
  %v74 = vld [vmem:[%s1 + $0x48] sm:$0xf]
  %v75 = vld [vmem:[%s1 + $0x4c] sm:$0xf]
  %v76 = vld [vmem:[%s1 + $0x50] sm:$0xf]
  %v77 = vld [vmem:[%s1 + $0x54] sm:$0xf]
  %v78 = vld [vmem:[%s1 + $0x58] sm:$0xf]
  %v79 = vld [vmem:[%s1 + $0x5c] sm:$0xf]
  %v80 = vld [vmem:[%s1 + $0x60] sm:$0xf]
  %v81 = vld [vmem:[%s1 + $0x64] sm:$0xf]
  %v82 = vld [vmem:[%s1 + $0x68] sm:$0xf]
  %v83 = vld [vmem:[%s1 + $0x6c] sm:$0xf]
  %v84 = vld [vmem:[%s1 + $0x70] sm:$0xf]
  %v85 = vld [vmem:[%s1 + $0x74] sm:$0xf]
  %v86 = vld [vmem:[%s1 + $0x78] sm:$0xf]
  %v87 = vld [vmem:[%s1 + $0x7c] sm:$0xf]
  %v88 = vld [vmem:[%s1 + $0x80] sm:$0xf]
  %v89 = vld [vmem:[%s1 + $0x84] sm:$0xf]
  %v90 = vld [vmem:[%s1 + $0x88] sm:$0xf]
  %v91 = vld [vmem:[%s1 + $0x8c] sm:$0xf]
  %v92 = vld [vmem:[%s1 + $0x90] sm:$0xf]
  %v93 = vld [vmem:[%s1 + $0x94] sm:$0xf]
  %v94 = vld [vmem:[%s1 + $0x98] sm:$0xf]
  %v95 = vld [vmem:[%s1 + $0x9c] sm:$0xf]
  %v96 = vld [vmem:[%s1 + $0xa0] sm:$0xf]
  %v97 = vld [vmem:[%s1 + $0xa4] sm:$0xf]
  %v98 = vld [vmem:[%s1 + $0xa8] sm:$0xf]
  %v99 = vld [vmem:[%s1 + $0xac] sm:$0xf]
  %v100 = vld [vmem:[%s1 + $0xb0] sm:$0xf]
  %v101 = vld [vmem:[%s1 + $0xb4] sm:$0xf]
  %v102 = vld [vmem:[%s1 + $0xb8] sm:$0xf]
  %v103 = vld [vmem:[%s1 + $0xbc] sm:$0xf]
  %v104 = vld [vmem:[%s2] sm:$0x1]
  %106 = vset.pattern.permute.xlu0 0
  %107 = vperm.xlu0 %106, %v54
  %v108 = vpop.permute.xlu0 %107
  %111 = vset.pattern.permute.xlu0 0
  %112 = vperm.xlu0 %111, %v55
  %v113 = vpop.permute.xlu0 %112
  %v116 = vlaneseq
  %v117 = vshrl.u32 %v116, 7
  %v118 = vsub.s32 0, %v117
  %v119 = vrot.slane %v104, %v118
  %v121 = vmul.f32 %v108, %v119
  %v122 = vmul.f32 %v113, %v119
  %v125 = vunpack.c.l.b16 %v44
  %v126 = vunpack.c.h.b16 %v44
  %v127 = vunpack.c.l.b16 %v45
  %v128 = vunpack.c.l.b16 %v46
  %v129 = vunpack.c.h.b16 %v46
  %v130 = vunpack.c.l.b16 %v47
  %v131 = vpack.c.b16 %v128, %v125
  %v132 = vpack.c.b16 %v129, %v126
  %v133 = vpack.c.b16 %v130, %v127
  %v185 = vunpack.c.l.b16 %v56
  %v186 = vunpack.c.l.b16 %v57
  %v187 = vunpack.c.l.b16 %v58
  %v188 = vunpack.c.l.b16 %v59
  %v189 = vunpack.c.l.b16 %v60
  %v190 = vunpack.c.l.b16 %v61
  %v191 = vunpack.c.l.b16 %v62
  %v192 = vunpack.c.l.b16 %v63
  %v193 = vunpack.c.l.b16 %v64
  %v194 = vunpack.c.l.b16 %v65
  %v195 = vunpack.c.l.b16 %v66
  %v196 = vunpack.c.l.b16 %v67
  %v197 = vunpack.c.l.b16 %v68
  %v198 = vunpack.c.l.b16 %v69
  %v199 = vunpack.c.l.b16 %v70
  %v200 = vunpack.c.l.b16 %v71
  %v201 = vunpack.c.l.b16 %v72
  %v202 = vunpack.c.l.b16 %v73
  %v203 = vunpack.c.l.b16 %v74
  %v204 = vunpack.c.l.b16 %v75
  %v205 = vunpack.c.l.b16 %v76
  %v206 = vunpack.c.l.b16 %v77
  %v207 = vunpack.c.l.b16 %v78
  %v208 = vunpack.c.l.b16 %v79
  %v209 = vunpack.c.l.b16 %v80
  %v210 = vunpack.c.l.b16 %v81
  %v211 = vunpack.c.l.b16 %v82
  %v212 = vunpack.c.l.b16 %v83
  %v213 = vunpack.c.l.b16 %v84
  %v214 = vunpack.c.l.b16 %v85
  %v215 = vunpack.c.l.b16 %v86
  %v216 = vunpack.c.l.b16 %v87
  %v217 = vunpack.c.l.b16 %v88
  %v218 = vunpack.c.l.b16 %v89
  %v219 = vunpack.c.l.b16 %v90
  %v220 = vunpack.c.l.b16 %v91
  %v221 = vunpack.c.l.b16 %v92
  %v222 = vunpack.c.l.b16 %v93
  %v223 = vunpack.c.l.b16 %v94
  %v224 = vunpack.c.l.b16 %v95
  %v225 = vunpack.c.l.b16 %v96
  %v226 = vunpack.c.l.b16 %v97
  %v227 = vunpack.c.l.b16 %v98
  %v228 = vunpack.c.l.b16 %v99
  %v229 = vunpack.c.l.b16 %v100
  %v230 = vunpack.c.l.b16 %v101
  %v231 = vunpack.c.l.b16 %v102
  %v232 = vunpack.c.l.b16 %v103
  %v233 = vpack.c.b16 %v186, %v185
  %v234 = vpack.c.b16 %v188, %v187
  %v235 = vpack.c.b16 %v190, %v189
  %v236 = vpack.c.b16 %v192, %v191
  %v237 = vpack.c.b16 %v194, %v193
  %v238 = vpack.c.b16 %v196, %v195
  %v239 = vpack.c.b16 %v198, %v197
  %v240 = vpack.c.b16 %v200, %v199
  %v241 = vpack.c.b16 %v202, %v201
  %v242 = vpack.c.b16 %v204, %v203
  %v243 = vpack.c.b16 %v206, %v205
  %v244 = vpack.c.b16 %v208, %v207
  %v245 = vpack.c.b16 %v210, %v209
  %v246 = vpack.c.b16 %v212, %v211
  %v247 = vpack.c.b16 %v214, %v213
  %v248 = vpack.c.b16 %v216, %v215
  %v249 = vpack.c.b16 %v218, %v217
  %v250 = vpack.c.b16 %v220, %v219
  %v251 = vpack.c.b16 %v222, %v221
  %v252 = vpack.c.b16 %v224, %v223
  %v253 = vpack.c.b16 %v226, %v225
  %v254 = vpack.c.b16 %v228, %v227
  %v255 = vpack.c.b16 %v230, %v229
  %v256 = vpack.c.b16 %v232, %v231
  %281 = vmatprep.subr.bf16.mxu0 0
  %282 = vmatpush1.bf16.msra.mxu0 %v233
  %283 = vmatprep.subr.bf16.mxu0 0
  %284 = vmatpush1.bf16.msra.mxu0 %v234
  %285 = vmatprep.subr.bf16.mxu0 0
  %286 = vmatpush1.bf16.msra.mxu0 %v235
  %287 = vmatprep.subr.bf16.mxu0 0
  %288 = vmatpush1.bf16.msra.mxu0 %v236
  %289 = vmatprep.subr.bf16.mxu0 0
  %290 = vmatpush1.bf16.msra.mxu0 %v237
  %291 = vmatprep.subr.bf16.mxu0 0
  %292 = vmatpush1.bf16.msra.mxu0 %v238
  %293 = vmatprep.subr.bf16.mxu0 0
  %294 = vmatpush1.bf16.msra.mxu0 %v239
  %295 = vmatprep.subr.bf16.mxu0 0
  %296 = vmatpush1.bf16.msra.mxu0 %v240
  %297 = vmatprep.subr.bf16.mxu0 0
  %298 = vmatpush1.bf16.msra.mxu0 %v241
  %299 = vmatprep.subr.bf16.mxu0 0
  %300 = vmatpush1.bf16.msra.mxu0 %v242
  %301 = vmatprep.subr.bf16.mxu0 0
  %302 = vmatpush1.bf16.msra.mxu0 %v243
  %303 = vmatprep.subr.bf16.mxu0 0
  %304 = vmatpush1.bf16.msra.mxu0 %v244
  %305 = vmatprep.subr.bf16.mxu0 0
  %306 = vmatpush1.bf16.msra.mxu0 %v245
  %307 = vmatprep.subr.bf16.mxu0 0
  %308 = vmatpush1.bf16.msra.mxu0 %v246
  %309 = vmatprep.subr.bf16.mxu0 0
  %310 = vmatpush1.bf16.msra.mxu0 %v247
  %311 = vmatprep.subr.bf16.mxu0 0
  %312 = vmatpush1.bf16.msra.mxu0 %v248
  %313 = vmatprep.mubr.bf16.mxu0 %v132
  %314 = vmatmul.mubr.bf16.gmra.mrb[0].mxu0 %v131
  %v315 = vpop.f32.mrb[0].mxu0
  %v316 = vadd.f32 %v121, %v315
  %v317 = vpop.f32.mrb[0].mxu0
  %v318 = vpop.f32.mrb[0].mxu0
  %v319 = vadd.f32 %v122, %v318
  %v320 = vpop.f32.mrb[0].mxu0
  %321 = vdwg.mxu0
  %322 = vmatprep.subr.bf16.mxu0 0
  %323 = vmatpush1.bf16.msra.mxu0 %v249
  %324 = vmatprep.subr.bf16.mxu0 0
  %325 = vmatpush1.bf16.msra.mxu0 %v250
  %326 = vmatprep.subr.bf16.mxu0 0
  %327 = vmatpush1.bf16.msra.mxu0 %v251
  %328 = vmatprep.subr.bf16.mxu0 0
  %329 = vmatpush1.bf16.msra.mxu0 %v252
  %330 = vmatprep.subr.bf16.mxu0 0
  %331 = vmatpush1.bf16.msra.mxu0 %v253
  %332 = vmatprep.subr.bf16.mxu0 0
  %333 = vmatpush1.bf16.msra.mxu0 %v254
  %334 = vmatprep.subr.bf16.mxu0 0
  %335 = vmatpush1.bf16.msra.mxu0 %v255
  %336 = vmatprep.subr.bf16.mxu0 0
  %337 = vmatpush1.bf16.msra.mxu0 %v256
  %338 = vmatprep.subr.bf16.mxu0 0
  %339 = vmatpush1.bf16.msra.mxu0 0
  %340 = vmatprep.subr.bf16.mxu0 0
  %341 = vmatpush1.bf16.msra.mxu0 0
  %342 = vmatprep.subr.bf16.mxu0 0
  %343 = vmatpush1.bf16.msra.mxu0 0
  %344 = vmatprep.subr.bf16.mxu0 0
  %345 = vmatpush1.bf16.msra.mxu0 0
  %346 = vmatprep.subr.bf16.mxu0 0
  %347 = vmatpush1.bf16.msra.mxu0 0
  %348 = vmatprep.subr.bf16.mxu0 0
  %349 = vmatpush1.bf16.msra.mxu0 0
  %350 = vmatprep.subr.bf16.mxu0 0
  %351 = vmatpush1.bf16.msra.mxu0 0
  %352 = vmatprep.subr.bf16.mxu0 0
  %353 = vmatpush1.bf16.msra.mxu0 0
  %354 = vmatprep.mubr.bf16.mxu0 0
  %355 = vmatmul.mubr.bf16.gmra.mrb[0].mxu0 %v133
  %v356 = vpop.f32.mrb[0].mxu0
  %v357 = vadd.f32 %v316, %v356
  %v358 = vpop.f32.mrb[0].mxu0
  %v359 = vpop.f32.mrb[0].mxu0
  %v360 = vadd.f32 %v319, %v359
  %v361 = vpop.f32.mrb[0].mxu0
  %362 = vdwg.mxu0
  %v363 = vld [vmem:[%s3] sm:$0x1]
  %v365 = vlaneseq
  %v366 = vshrl.u32 %v365, 7
  %v367 = vsub.s32 0, %v366
  %v368 = vrot.slane %v363, %v367
  %v370 = vadd.f32 %v357, %v368
  %v371 = vadd.f32 %v360, %v368
  %vm372 = vcmp.gt.f32.partialorder %v370, 0.0
  %vm373 = vcmp.gt.f32.partialorder %v371, 0.0
  %v374 = vmul.f32 %v370, 0.01
  %v375 = vmul.f32 %v371, 0.01
  %v376 = vsel %vm372, %v370, %v374
  %v377 = vsel %vm373, %v371, %v375
  %v378 = vld [vmem:[%s4] sm:$0xff]
  %v379 = vld [vmem:[%s4 + $0x8] sm:$0xff]
  %v380 = vld [vmem:[%s4 + $0x10] sm:$0xff]
  %v381 = vld [vmem:[%s4 + $0x18] sm:$0xff]
  %v382 = vld [vmem:[%s4 + $0x20] sm:$0xff]
  %v383 = vld [vmem:[%s4 + $0x28] sm:$0xff]
  %v384 = vld [vmem:[%s5] sm:$0x1]
  %v386 = vlaneseq
  %v387 = vshrl.u32 %v386, 7
  %v388 = vsub.s32 0, %v387
  %v389 = vrot.slane %v384, %v388
  %vm391 = vcmask 392192
  %v393 = vsel %vm391, %v376, 0
  %v396 = vsel %vm391, %v377, 0
  %398 = vmatprep.subr.mxu0 0.0
  %399 = vmatpush1.msra.mxu0 %v378
  %400 = vmatprep.subr.mxu0 0.0
  %401 = vmatpush1.msra.mxu0 %v379
  %402 = vmatprep.subr.mxu0 0.0
  %403 = vmatpush1.msra.mxu0 %v380
  %404 = vmatprep.subr.mxu0 0.0
  %405 = vmatpush1.msra.mxu0 %v381
  %406 = vmatprep.subr.mxu0 0.0
  %407 = vmatpush1.msra.mxu0 %v382
  %408 = vmatprep.subr.mxu0 0.0
  %409 = vmatpush1.msra.mxu0 %v383
  %410 = vmatprep.subr.mxu0 0.0
  %411 = vmatpush1.msra.mxu0 0.0
  %412 = vmatprep.subr.mxu0 0.0
  %413 = vmatpush1.msra.mxu0 0.0
  %414 = vmatprep.subr.mxu0 0.0
  %415 = vmatpush1.msra.mxu0 0.0
  %416 = vmatprep.subr.mxu0 0.0
  %417 = vmatpush1.msra.mxu0 0.0
  %418 = vmatprep.subr.mxu0 0.0
  %419 = vmatpush1.msra.mxu0 0.0
  %420 = vmatprep.subr.mxu0 0.0
  %421 = vmatpush1.msra.mxu0 0.0
  %422 = vmatprep.subr.mxu0 0.0
  %423 = vmatpush1.msra.mxu0 0.0
  %424 = vmatprep.subr.mxu0 0.0
  %425 = vmatpush1.msra.mxu0 0.0
  %426 = vmatprep.subr.mxu0 0.0
  %427 = vmatpush1.msra.mxu0 0.0
  %428 = vmatprep.subr.mxu0 0.0
  %429 = vmatpush1.msra.mxu0 0.0
  %430 = vmatprep.subr.mxu0 0.0
  %431 = vmatpush1.msra.mxu0 0.0
  %432 = vmatprep.subr.mxu0 0.0
  %433 = vmatpush1.msra.mxu0 0.0
  %434 = vmatprep.subr.mxu0 0.0
  %435 = vmatpush1.msra.mxu0 0.0
  %436 = vmatprep.subr.mxu0 0.0
  %437 = vmatpush1.msra.mxu0 0.0
  %438 = vmatprep.subr.mxu0 0.0
  %439 = vmatpush1.msra.mxu0 0.0
  %440 = vmatprep.subr.mxu0 0.0
  %441 = vmatpush1.msra.mxu0 0.0
  %442 = vmatprep.subr.mxu0 0.0
  %443 = vmatpush1.msra.mxu0 0.0
  %444 = vmatprep.subr.mxu0 0.0
  %445 = vmatpush1.msra.mxu0 0.0
  %446 = vmatprep.subr.mxu0 0.0
  %447 = vmatpush1.msra.mxu0 0.0
  %448 = vmatprep.subr.mxu0 0.0
  %449 = vmatpush1.msra.mxu0 0.0
  %450 = vmatprep.subr.mxu0 0.0
  %451 = vmatpush1.msra.mxu0 0.0
  %452 = vmatprep.subr.mxu0 0.0
  %453 = vmatpush1.msra.mxu0 0.0
  %454 = vmatprep.subr.mxu0 0.0
  %455 = vmatpush1.msra.mxu0 0.0
  %456 = vmatprep.subr.mxu0 0.0
  %457 = vmatpush1.msra.mxu0 0.0
  %458 = vmatprep.subr.mxu0 0.0
  %459 = vmatpush1.msra.mxu0 0.0
  %460 = vmatprep.subr.mxu0 0.0
  %461 = vmatpush1.msra.mxu0 0.0
  %462 = vmatprep.mubr.f32.mxu0 0.0
  %463 = vmatmul.mubr.f32.gmra.mrb[0].mxu0 %v393
  %v464 = vpop.f32.mrb[0].mxu0
  %v465 = vadd.f32 %v389, %v464
  %v466 = vpop.f32.mrb[0].mxu0
  %467 = vmatprep.mubr.f32.mxu0 0.0
  %468 = vmatmul.mubr.f32.gmra.mrb[0].mxu0 %v396
  %v469 = vpop.f32.mrb[0].mxu0
  %v470 = vadd.f32 %v389, %v469
  %v471 = vpop.f32.mrb[0].mxu0
  %472 = vdwg.mxu0
  %vm473 = vcmp.gt.f32.partialorder %v465, 0.0
  %vm474 = vcmp.gt.f32.partialorder %v470, 0.0
  %v475 = vmul.f32 %v465, 0.01
  %v476 = vmul.f32 %v470, 0.01
  %v477 = vsel %vm473, %v465, %v475
  %v478 = vsel %vm474, %v470, %v476
  %v479 = vld [vmem:[%s6] sm:$0xff]
  %v480 = vld [vmem:[%s6 + $0x8] sm:$0xff]
  %v481 = vld [vmem:[%s6 + $0x10] sm:$0xff]
  %v482 = vld [vmem:[%s7] sm:$0x1]
  %v484 = vlaneseq
  %v485 = vshrl.u32 %v484, 7
  %v486 = vsub.s32 0, %v485
  %v487 = vrot.slane %v482, %v486
  %vm489 = vcmask 195584
  %v491 = vsel %vm489, %v477, 0
  %v494 = vsel %vm489, %v478, 0
  %496 = vmatprep.subr.mxu0 0.0
  %497 = vmatpush1.msra.mxu0 %v479
  %498 = vmatprep.subr.mxu0 0.0
  %499 = vmatpush1.msra.mxu0 %v480
  %500 = vmatprep.subr.mxu0 0.0
  %501 = vmatpush1.msra.mxu0 %v481
  %502 = vmatprep.subr.mxu0 0.0
  %503 = vmatpush1.msra.mxu0 0.0
  %504 = vmatprep.subr.mxu0 0.0
  %505 = vmatpush1.msra.mxu0 0.0
  %506 = vmatprep.subr.mxu0 0.0
  %507 = vmatpush1.msra.mxu0 0.0
  %508 = vmatprep.subr.mxu0 0.0
  %509 = vmatpush1.msra.mxu0 0.0
  %510 = vmatprep.subr.mxu0 0.0
  %511 = vmatpush1.msra.mxu0 0.0
  %512 = vmatprep.subr.mxu0 0.0
  %513 = vmatpush1.msra.mxu0 0.0
  %514 = vmatprep.subr.mxu0 0.0
  %515 = vmatpush1.msra.mxu0 0.0
  %516 = vmatprep.subr.mxu0 0.0
  %517 = vmatpush1.msra.mxu0 0.0
  %518 = vmatprep.subr.mxu0 0.0
  %519 = vmatpush1.msra.mxu0 0.0
  %520 = vmatprep.subr.mxu0 0.0
  %521 = vmatpush1.msra.mxu0 0.0
  %522 = vmatprep.subr.mxu0 0.0
  %523 = vmatpush1.msra.mxu0 0.0
  %524 = vmatprep.subr.mxu0 0.0
  %525 = vmatpush1.msra.mxu0 0.0
  %526 = vmatprep.subr.mxu0 0.0
  %527 = vmatpush1.msra.mxu0 0.0
  %528 = vmatprep.subr.mxu0 0.0
  %529 = vmatpush1.msra.mxu0 0.0
  %530 = vmatprep.subr.mxu0 0.0
  %531 = vmatpush1.msra.mxu0 0.0
  %532 = vmatprep.subr.mxu0 0.0
  %533 = vmatpush1.msra.mxu0 0.0
  %534 = vmatprep.subr.mxu0 0.0
  %535 = vmatpush1.msra.mxu0 0.0
  %536 = vmatprep.subr.mxu0 0.0
  %537 = vmatpush1.msra.mxu0 0.0
  %538 = vmatprep.subr.mxu0 0.0
  %539 = vmatpush1.msra.mxu0 0.0
  %540 = vmatprep.subr.mxu0 0.0
  %541 = vmatpush1.msra.mxu0 0.0
  %542 = vmatprep.subr.mxu0 0.0
  %543 = vmatpush1.msra.mxu0 0.0
  %544 = vmatprep.subr.mxu0 0.0
  %545 = vmatpush1.msra.mxu0 0.0
  %546 = vmatprep.subr.mxu0 0.0
  %547 = vmatpush1.msra.mxu0 0.0
  %548 = vmatprep.subr.mxu0 0.0
  %549 = vmatpush1.msra.mxu0 0.0
  %550 = vmatprep.subr.mxu0 0.0
  %551 = vmatpush1.msra.mxu0 0.0
  %552 = vmatprep.subr.mxu0 0.0
  %553 = vmatpush1.msra.mxu0 0.0
  %554 = vmatprep.subr.mxu0 0.0
  %555 = vmatpush1.msra.mxu0 0.0
  %556 = vmatprep.subr.mxu0 0.0
  %557 = vmatpush1.msra.mxu0 0.0
  %558 = vmatprep.subr.mxu0 0.0
  %559 = vmatpush1.msra.mxu0 0.0
  %560 = vmatprep.mubr.f32.mxu0 0.0
  %561 = vmatmul.mubr.f32.gmra.mrb[0].mxu0 %v491
  %v562 = vpop.f32.mrb[0].mxu0
  %v563 = vadd.f32 %v487, %v562
  %v564 = vpop.f32.mrb[0].mxu0
  %565 = vmatprep.mubr.f32.mxu0 0.0
  %566 = vmatmul.mubr.f32.gmra.mrb[0].mxu0 %v494
  %v567 = vpop.f32.mrb[0].mxu0
  %v568 = vadd.f32 %v487, %v567
  %v569 = vpop.f32.mrb[0].mxu0
  %570 = vdwg.mxu0
  %vm571 = vcmp.gt.f32.partialorder %v563, 0.0
  %vm572 = vcmp.gt.f32.partialorder %v568, 0.0
  %v573 = vmul.f32 %v563, 0.01
  %v574 = vmul.f32 %v568, 0.01
  %v575 = vsel %vm571, %v563, %v573
  %v576 = vsel %vm572, %v568, %v574
  %v577 = vld [vmem:[%s8] sm:$0xff]
  %v578 = vld [vmem:[%s8 + $0x8] sm:$0xff]
  %v579 = vld [vmem:[%s9] sm:$0x1]
  %v581 = vlaneseq
  %v582 = vshrl.u32 %v581, 7
  %v583 = vsub.s32 0, %v582
  %v584 = vrot.slane %v579, %v583
  %vm586 = vcmask 130048
  %v588 = vsel %vm586, %v575, 0
  %v591 = vsel %vm586, %v576, 0
  %593 = vmatprep.subr.mxu0 0.0
  %594 = vmatpush1.msra.mxu0 %v577
  %595 = vmatprep.subr.mxu0 0.0
  %596 = vmatpush1.msra.mxu0 %v578
  %597 = vmatprep.subr.mxu0 0.0
  %598 = vmatpush1.msra.mxu0 0.0
  %599 = vmatprep.subr.mxu0 0.0
  %600 = vmatpush1.msra.mxu0 0.0
  %601 = vmatprep.subr.mxu0 0.0
  %602 = vmatpush1.msra.mxu0 0.0
  %603 = vmatprep.subr.mxu0 0.0
  %604 = vmatpush1.msra.mxu0 0.0
  %605 = vmatprep.subr.mxu0 0.0
  %606 = vmatpush1.msra.mxu0 0.0
  %607 = vmatprep.subr.mxu0 0.0
  %608 = vmatpush1.msra.mxu0 0.0
  %609 = vmatprep.subr.mxu0 0.0
  %610 = vmatpush1.msra.mxu0 0.0
  %611 = vmatprep.subr.mxu0 0.0
  %612 = vmatpush1.msra.mxu0 0.0
  %613 = vmatprep.subr.mxu0 0.0
  %614 = vmatpush1.msra.mxu0 0.0
  %615 = vmatprep.subr.mxu0 0.0
  %616 = vmatpush1.msra.mxu0 0.0
  %617 = vmatprep.subr.mxu0 0.0
  %618 = vmatpush1.msra.mxu0 0.0
  %619 = vmatprep.subr.mxu0 0.0
  %620 = vmatpush1.msra.mxu0 0.0
  %621 = vmatprep.subr.mxu0 0.0
  %622 = vmatpush1.msra.mxu0 0.0
  %623 = vmatprep.subr.mxu0 0.0
  %624 = vmatpush1.msra.mxu0 0.0
  %625 = vmatprep.subr.mxu0 0.0
  %626 = vmatpush1.msra.mxu0 0.0
  %627 = vmatprep.subr.mxu0 0.0
  %628 = vmatpush1.msra.mxu0 0.0
  %629 = vmatprep.subr.mxu0 0.0
  %630 = vmatpush1.msra.mxu0 0.0
  %631 = vmatprep.subr.mxu0 0.0
  %632 = vmatpush1.msra.mxu0 0.0
  %633 = vmatprep.subr.mxu0 0.0
  %634 = vmatpush1.msra.mxu0 0.0
  %635 = vmatprep.subr.mxu0 0.0
  %636 = vmatpush1.msra.mxu0 0.0
  %637 = vmatprep.subr.mxu0 0.0
  %638 = vmatpush1.msra.mxu0 0.0
  %639 = vmatprep.subr.mxu0 0.0
  %640 = vmatpush1.msra.mxu0 0.0
  %641 = vmatprep.subr.mxu0 0.0
  %642 = vmatpush1.msra.mxu0 0.0
  %643 = vmatprep.subr.mxu0 0.0
  %644 = vmatpush1.msra.mxu0 0.0
  %645 = vmatprep.subr.mxu0 0.0
  %646 = vmatpush1.msra.mxu0 0.0
  %647 = vmatprep.subr.mxu0 0.0
  %648 = vmatpush1.msra.mxu0 0.0
  %649 = vmatprep.subr.mxu0 0.0
  %650 = vmatpush1.msra.mxu0 0.0
  %651 = vmatprep.subr.mxu0 0.0
  %652 = vmatpush1.msra.mxu0 0.0
  %653 = vmatprep.subr.mxu0 0.0
  %654 = vmatpush1.msra.mxu0 0.0
  %655 = vmatprep.subr.mxu0 0.0
  %656 = vmatpush1.msra.mxu0 0.0
  %657 = vmatprep.mubr.f32.mxu0 0.0
  %658 = vmatmul.mubr.f32.gmra.mrb[0].mxu0 %v588
  %v659 = vpop.f32.mrb[0].mxu0
  %v660 = vadd.f32 %v584, %v659
  %v661 = vpop.f32.mrb[0].mxu0
  %662 = vmatprep.mubr.f32.mxu0 0.0
  %663 = vmatmul.mubr.f32.gmra.mrb[0].mxu0 %v591
  %v664 = vpop.f32.mrb[0].mxu0
  %v665 = vadd.f32 %v584, %v664
  %v666 = vpop.f32.mrb[0].mxu0
  %667 = vdwg.mxu0
  %vm668 = vcmp.gt.f32.partialorder %v660, 0.0
  %vm669 = vcmp.gt.f32.partialorder %v665, 0.0
  %v670 = vmul.f32 %v660, 0.01
  %v671 = vmul.f32 %v665, 0.01
  %v672 = vsel %vm668, %v660, %v670
  %v673 = vsel %vm669, %v665, %v671
  %v674 = vld [vmem:[%s10] sm:$0xff]
  %v675 = vld [vmem:[#allocation2] sm:$0x1]
  %v677 = vlaneseq
  %v678 = vshrl.u32 %v677, 7
  %v679 = vsub.s32 0, %v678
  %v680 = vrot.slane %v675, %v679
  %vm682 = vcmask 64512
  %v684 = vsel %vm682, %v672, 0
  %v687 = vsel %vm682, %v673, 0
  %689 = vmatprep.subr.mxu0 0.0
  %690 = vmatpush1.msra.mxu0 %v674
  %691 = vmatprep.subr.mxu0 0.0
  %692 = vmatpush1.msra.mxu0 0.0
  %693 = vmatprep.subr.mxu0 0.0
  %694 = vmatpush1.msra.mxu0 0.0
  %695 = vmatprep.subr.mxu0 0.0
  %696 = vmatpush1.msra.mxu0 0.0
  %697 = vmatprep.subr.mxu0 0.0
  %698 = vmatpush1.msra.mxu0 0.0
  %699 = vmatprep.subr.mxu0 0.0
  %700 = vmatpush1.msra.mxu0 0.0
  %701 = vmatprep.subr.mxu0 0.0
  %702 = vmatpush1.msra.mxu0 0.0
  %703 = vmatprep.subr.mxu0 0.0
  %704 = vmatpush1.msra.mxu0 0.0
  %705 = vmatprep.subr.mxu0 0.0
  %706 = vmatpush1.msra.mxu0 0.0
  %707 = vmatprep.subr.mxu0 0.0
  %708 = vmatpush1.msra.mxu0 0.0
  %709 = vmatprep.subr.mxu0 0.0
  %710 = vmatpush1.msra.mxu0 0.0
  %711 = vmatprep.subr.mxu0 0.0
  %712 = vmatpush1.msra.mxu0 0.0
  %713 = vmatprep.subr.mxu0 0.0
  %714 = vmatpush1.msra.mxu0 0.0
  %715 = vmatprep.subr.mxu0 0.0
  %716 = vmatpush1.msra.mxu0 0.0
  %717 = vmatprep.subr.mxu0 0.0
  %718 = vmatpush1.msra.mxu0 0.0
  %719 = vmatprep.subr.mxu0 0.0
  %720 = vmatpush1.msra.mxu0 0.0
  %721 = vmatprep.subr.mxu0 0.0
  %722 = vmatpush1.msra.mxu0 0.0
  %723 = vmatprep.subr.mxu0 0.0
  %724 = vmatpush1.msra.mxu0 0.0
  %725 = vmatprep.subr.mxu0 0.0
  %726 = vmatpush1.msra.mxu0 0.0
  %727 = vmatprep.subr.mxu0 0.0
  %728 = vmatpush1.msra.mxu0 0.0
  %729 = vmatprep.subr.mxu0 0.0
  %730 = vmatpush1.msra.mxu0 0.0
  %731 = vmatprep.subr.mxu0 0.0
  %732 = vmatpush1.msra.mxu0 0.0
  %733 = vmatprep.subr.mxu0 0.0
  %734 = vmatpush1.msra.mxu0 0.0
  %735 = vmatprep.subr.mxu0 0.0
  %736 = vmatpush1.msra.mxu0 0.0
  %737 = vmatprep.subr.mxu0 0.0
  %738 = vmatpush1.msra.mxu0 0.0
  %739 = vmatprep.subr.mxu0 0.0
  %740 = vmatpush1.msra.mxu0 0.0
  %741 = vmatprep.subr.mxu0 0.0
  %742 = vmatpush1.msra.mxu0 0.0
  %743 = vmatprep.subr.mxu0 0.0
  %744 = vmatpush1.msra.mxu0 0.0
  %745 = vmatprep.subr.mxu0 0.0
  %746 = vmatpush1.msra.mxu0 0.0
  %747 = vmatprep.subr.mxu0 0.0
  %748 = vmatpush1.msra.mxu0 0.0
  %749 = vmatprep.subr.mxu0 0.0
  %750 = vmatpush1.msra.mxu0 0.0
  %751 = vmatprep.subr.mxu0 0.0
  %752 = vmatpush1.msra.mxu0 0.0
  %753 = vmatprep.mubr.f32.mxu0 0.0
  %754 = vmatmul.mubr.f32.gmra.mrb[0].mxu0 %v684
  %v755 = vpop.f32.mrb[0].mxu0
  %v756 = vadd.f32 %v680, %v755
  %v757 = vpop.f32.mrb[0].mxu0
  %758 = vmatprep.mubr.f32.mxu0 0.0
  %759 = vmatmul.mubr.f32.gmra.mrb[0].mxu0 %v687
  %v760 = vpop.f32.mrb[0].mxu0
  %v761 = vadd.f32 %v680, %v760
  %v762 = vpop.f32.mrb[0].mxu0
  %763 = vdwg.mxu0
  %vm764 = vcmask 7168
  %765 = vst.msk [vmem:[%s12] sm:$0xff] %vm764, %v756
  %766 = vst.msk [vmem:[%s12 + $0x8] sm:$0xff] %vm764, %v761
  // Predicated region
  $region50: #{tpu_custom_call.1} parent=0 // pred_check
    _
  $region51: #{tpu_custom_call.1} parent=0 // pred_check_branch
    %768 = sbr.rel (0) target = $region53
  $region52: #{tpu_custom_call.1} parent=0 // pred_region
    _
  $region53: #{tpu_custom_call.1} parent=0 // pred_fallthru
    _
  // Predicated region
  $region54: #{tpu_custom_call.1} parent=0 // pred_check
    _
  $region55: #{tpu_custom_call.1} parent=0 // pred_check_branch
    %770 = sbr.rel (0) target = $region57
  $region56: #{tpu_custom_call.1} parent=0 // pred_region
    _
  $region57: #{tpu_custom_call.1} parent=0 // pred_fallthru
    _

</llo_original>
